<compile_context>
chip_gen: v7x
topology: tpu7x:2x2x1
jax: 0.10.0
libtpu: 0.0.40
codegen_flags: <defaults>
</compile_context>

<pallas_src>
import jax
import jax.numpy as jnp
from jax.experimental import pallas as pl
from jax.experimental.pallas import tpu as pltpu

_LANES = 128


def _regress_boxes_kernel(anc_ref, reg_ref, out_ref):
    """Processes a (tm, 128) tile of the flattened anchor-major layout."""
    anc = anc_ref[...].astype(jnp.float32)
    reg = reg_ref[...].astype(jnp.float32)

    lane = jax.lax.broadcasted_iota(jnp.int32, (1, _LANES), 1)
    m01 = (lane & 3) < 2                       # lanes 0,1 of every 4-lane group
    m_even = (lane & 1) == 0                   # even lanes
    sign01 = jnp.where(m01, 1.0, -1.0).astype(jnp.float32)  # +1 on lanes 0,1

    def lroll(v, s):                           # lane-axis rotation (XLU)
        return pltpu.roll(v, shift=s, axis=1)

    # Partner at distance 2 inside each group: [x2, y2, x1, y1].
    anc_p2 = jnp.where(m01, lroll(anc, _LANES - 2), lroll(anc, 2))
    ctr = (anc + anc_p2) * 0.5                 # [cxa, cya, cxa, cya]
    sz = sign01 * (anc_p2 - anc)               # [wa,  ha,  wa,  ha ] (exact)

    # reg = [ty, tx, th, tw] -> swap adjacent pairs: [tx, ty, tw, th]
    reg_sw = jnp.where(m_even, lroll(reg, _LANES - 1), lroll(reg, 1))
    # partner-2 of reg_sw: [tw, th, tx, ty]
    reg_sw_p2 = jnp.where(m01, lroll(reg_sw, _LANES - 2), lroll(reg_sw, 2))
    t_ctr = jnp.where(m01, reg_sw, reg_sw_p2)  # [tx, ty, tx, ty]
    t_sz = jnp.where(m01, reg_sw_p2, reg_sw)   # [tw, th, tw, th]

    c = t_ctr * sz + ctr                       # [cx,  cy,  cx,  cy ]
    half = jnp.exp(t_sz) * (sz * 0.5)          # [w/2, h/2, w/2, h/2]
    out = c - sign01 * half                    # [xmin,ymin,xmax,ymax]
    out_ref[...] = out.astype(out_ref.dtype)


def regress_boxes(anchors, regression, *, block_rows=1024):
    """bbox_transform_inv for anchors / regression of shape (..., 4)."""
    if anchors.shape != regression.shape or anchors.shape[-1] != 4:
        raise ValueError("anchors and regression must share a (..., 4) shape")
    # TODO(synk): scale_factors is None in RegressBoxes.forward, so no delta scaling.

    out_dtype = jnp.promote_types(anchors.dtype, regression.dtype)
    orig_shape = anchors.shape
    n_elem = anchors.size

    anc = anchors.astype(out_dtype).reshape(-1)
    reg = regression.astype(out_dtype).reshape(-1)

    # Pad only to a 128-lane multiple (triggers only when the box count is not
    # a multiple of 32); partial final row-blocks are clipped by Pallas.
    pad = (-n_elem) % _LANES
    if pad:
        anc = jnp.pad(anc, (0, pad))
        reg = jnp.pad(reg, (0, pad))
    rows = (n_elem + pad) // _LANES
    anc = anc.reshape(rows, _LANES)
    reg = reg.reshape(rows, _LANES)

    itemsize = jnp.dtype(out_dtype).itemsize
    sub = {1: 32, 2: 16}.get(itemsize, 8)      # dtype-dependent sublane multiple

    if rows <= sub:
        tm = rows                              # full-array block (no tiling rule)
        grid = (1,)
    else:
        # Aim for >= ~8 grid steps: overlapped in/out DMA + v7x dual-TC sharding.
        tm_target = -(-rows // 8)
        tm = ((tm_target + sub - 1) // sub) * sub
        tm = max(sub, min(tm, max(sub, (block_rows // sub) * sub)))
        grid = (pl.cdiv(rows, tm),)
    spec = pl.BlockSpec((tm, _LANES), lambda i: (i, 0))

    # VMEM demand: 3 operands x 2 pipeline buffers x block; give some slack.
    block_bytes = tm * _LANES * itemsize
    vmem_bytes = int(min(64 << 20, max(2 << 20, 8 * block_bytes)))

    out = pl.pallas_call(
        _regress_boxes_kernel,
        out_shape=jax.ShapeDtypeStruct((rows, _LANES), out_dtype),
        grid_spec=pltpu.PrefetchScalarGridSpec(
            num_scalar_prefetch=0,
            grid=grid,
            in_specs=[spec, spec],
            out_specs=spec,
        ),
        compiler_params=pltpu.CompilerParams(
            dimension_semantics=("parallel",),
            vmem_limit_bytes=vmem_bytes,
        ),
        cost_estimate=pl.CostEstimate(
            flops=10 * n_elem,
            transcendentals=n_elem,
            bytes_accessed=3 * n_elem * itemsize,
        ),
    )(anc, reg)

    out = out.reshape(-1)
    if pad:
        out = out[:n_elem]
    return out.reshape(orig_shape)


def _regress_boxes_ref(anchors, regression):
    """Pure-JAX reference mirroring bbox_transform_inv."""
    cxa = (anchors[..., 0] + anchors[..., 2]) / 2
    cya = (anchors[..., 1] + anchors[..., 3]) / 2
    wa = anchors[..., 2] - anchors[..., 0]
    ha = anchors[..., 3] - anchors[..., 1]
    ty, tx, th, tw = (regression[..., 0], regression[..., 1],
                      regression[..., 2], regression[..., 3])
    w = jnp.exp(tw) * wa
    h = jnp.exp(th) * ha
    cy = ty * ha + cya
    cx = tx * wa + cxa
    ymin = cy - h / 2.0
    xmin = cx - w / 2.0
    ymax = cy + h / 2.0
    xmax = cx + w / 2.0
    return jnp.stack([xmin, ymin, xmax, ymax], axis=-1)


def _make_boxes(key, shape_prefix):
    k1, k2, k3 = jax.random.split(key, 3)
    xy1 = jax.random.uniform(k1, shape_prefix + (2,), jnp.float32, 0.0, 50.0)
    wh = jax.random.uniform(k2, shape_prefix + (2,), jnp.float32, 1.0, 30.0)
    anchors = jnp.concatenate([xy1, xy1 + wh], axis=-1)
    regression = jax.random.normal(k3, shape_prefix + (4,), jnp.float32) * 0.1
    return anchors, regression


if __name__ == "__main__":
    key = jax.random.PRNGKey(0)
    k_main, k_rag, k_part = jax.random.split(key, 3)

    # Main test: (B, N, 4) anchors / deltas -> rows=16, tm=8, 2 grid steps.
    B, N = 2, 256
    anchors, regression = _make_boxes(k_main, (B, N))
    out = jax.block_until_ready(regress_boxes(anchors, regression))
    ref = _regress_boxes_ref(anchors, regression)
    assert out.shape == (B, N, 4)
    assert jnp.allclose(out, ref, atol=1e-5, rtol=1e-5)

    # Ragged test: box count not a multiple of 32 (exercises the 128-elem pad
    # and a full-array block smaller than 8 sublanes).
    M = 37
    anchors_b, regression_b = _make_boxes(k_rag, (M,))
    out_b = jax.block_until_ready(regress_boxes(anchors_b, regression_b))
    ref_b = _regress_boxes_ref(anchors_b, regression_b)
    assert out_b.shape == (M, 4)
    assert jnp.allclose(out_b, ref_b, atol=1e-5, rtol=1e-5)

    # Partial-final-block test: 640 boxes -> rows=20, tm=8, grid=3 with a
    # clipped 4-row final block (no wrapper padding, no output slicing).
    P = 640
    anchors_c, regression_c = _make_boxes(k_part, (P,))
    out_c = jax.block_until_ready(regress_boxes(anchors_c, regression_c))
    ref_c = _regress_boxes_ref(anchors_c, regression_c)
    assert out_c.shape == (P, 4)
    assert jnp.allclose(out_c, ref_c, atol=1e-5, rtol=1e-5)

    print("KERNEL_OK")
</pallas_src>

<mosaic_0001>
module attributes {stable_mosaic.version = 11 : i64} {
  func.func @_regress_boxes_kernel(%arg0: i32, %arg1: memref<8x128xf32, #tpu.memory_space<vmem>>, %arg2: memref<8x128xf32, #tpu.memory_space<vmem>>, %arg3: memref<8x128xf32, #tpu.memory_space<vmem>>) attributes {dimension_semantics = [#tpu.dimension_semantics<parallel>], iteration_bounds = array<i64: 2>, scalar_prefetch = 0 : i64, scratch_operands = 0 : i64, tpu.core_type = #tpu.core_type<tc>, window_params = [{transform_indices = @transform_0, window_bounds = array<i64: 8, 128>}, {transform_indices = @transform_1, window_bounds = array<i64: 8, 128>}, {transform_indices = @transform_2, window_bounds = array<i64: 8, 128>}]} {
    %c0 = arith.constant 0 : index
    %c0_0 = arith.constant 0 : index
    %0 = vector.load %arg1[%c0, %c0_0] : memref<8x128xf32, #tpu.memory_space<vmem>>, vector<8x128xf32>
    %c0_1 = arith.constant 0 : index
    %c0_2 = arith.constant 0 : index
    %1 = vector.load %arg2[%c0_1, %c0_2] : memref<8x128xf32, #tpu.memory_space<vmem>>, vector<8x128xf32>
    %2 = tpu.iota {dimensions = array<i32: 1>} : vector<1x128xi32>
    %c3_i32 = arith.constant 3 : i32
    %3 = vector.broadcast %c3_i32 : i32 to vector<1x128xi32>
    %4 = arith.andi %2, %3 : vector<1x128xi32>
    %c2_i32 = arith.constant 2 : i32
    %5 = vector.broadcast %c2_i32 : i32 to vector<1x128xi32>
    %6 = arith.cmpi slt, %4, %5 : vector<1x128xi32>
    %c1_i32 = arith.constant 1 : i32
    %7 = vector.broadcast %c1_i32 : i32 to vector<1x128xi32>
    %8 = arith.andi %2, %7 : vector<1x128xi32>
    %c0_i32 = arith.constant 0 : i32
    %9 = vector.broadcast %c0_i32 : i32 to vector<1x128xi32>
    %10 = arith.cmpi eq, %8, %9 : vector<1x128xi32>
    %cst = arith.constant 1.000000e+00 : f32
    %cst_3 = arith.constant -1.000000e+00 : f32
    %11 = vector.broadcast %cst : f32 to vector<1x128xf32>
    %12 = vector.broadcast %cst_3 : f32 to vector<1x128xf32>
    %13 = arith.select %6, %11, %12 : vector<1x128xi1>, vector<1x128xf32>
    %c126_i32 = arith.constant 126 : i32
    %14 = tpu.dynamic_rotate %0 by %c126_i32 dim 1 : vector<8x128xf32>, i32 -> vector<8x128xf32>
    %c2_i32_4 = arith.constant 2 : i32
    %15 = tpu.dynamic_rotate %0 by %c2_i32_4 dim 1 : vector<8x128xf32>, i32 -> vector<8x128xf32>
    %16 = vector.shape_cast %6 : vector<1x128xi1> to vector<1x128xi1>
    %17 = vector.broadcast %16 : vector<1x128xi1> to vector<8x128xi1>
    %18 = arith.select %17, %14, %15 : vector<8x128xi1>, vector<8x128xf32>
    %19 = arith.addf %0, %18 : vector<8x128xf32>
    %cst_5 = arith.constant 5.000000e-01 : f32
    %20 = vector.broadcast %cst_5 : f32 to vector<8x128xf32>
    %21 = arith.mulf %19, %20 : vector<8x128xf32>
    %22 = arith.subf %18, %0 : vector<8x128xf32>
    %23 = vector.broadcast %13 : vector<1x128xf32> to vector<8x128xf32>
    %24 = arith.mulf %23, %22 : vector<8x128xf32>
    %c127_i32 = arith.constant 127 : i32
    %25 = tpu.dynamic_rotate %1 by %c127_i32 dim 1 : vector<8x128xf32>, i32 -> vector<8x128xf32>
    %c1_i32_6 = arith.constant 1 : i32
    %26 = tpu.dynamic_rotate %1 by %c1_i32_6 dim 1 : vector<8x128xf32>, i32 -> vector<8x128xf32>
    %27 = vector.shape_cast %10 : vector<1x128xi1> to vector<1x128xi1>
    %28 = vector.broadcast %27 : vector<1x128xi1> to vector<8x128xi1>
    %29 = arith.select %28, %25, %26 : vector<8x128xi1>, vector<8x128xf32>
    %c126_i32_7 = arith.constant 126 : i32
    %30 = tpu.dynamic_rotate %29 by %c126_i32_7 dim 1 : vector<8x128xf32>, i32 -> vector<8x128xf32>
    %c2_i32_8 = arith.constant 2 : i32
    %31 = tpu.dynamic_rotate %29 by %c2_i32_8 dim 1 : vector<8x128xf32>, i32 -> vector<8x128xf32>
    %32 = vector.shape_cast %6 : vector<1x128xi1> to vector<1x128xi1>
    %33 = vector.broadcast %32 : vector<1x128xi1> to vector<8x128xi1>
    %34 = arith.select %33, %30, %31 : vector<8x128xi1>, vector<8x128xf32>
    %35 = vector.shape_cast %6 : vector<1x128xi1> to vector<1x128xi1>
    %36 = vector.broadcast %35 : vector<1x128xi1> to vector<8x128xi1>
    %37 = arith.select %36, %29, %34 : vector<8x128xi1>, vector<8x128xf32>
    %38 = vector.shape_cast %6 : vector<1x128xi1> to vector<1x128xi1>
    %39 = vector.broadcast %38 : vector<1x128xi1> to vector<8x128xi1>
    %40 = arith.select %39, %34, %29 : vector<8x128xi1>, vector<8x128xf32>
    %41 = arith.mulf %37, %24 : vector<8x128xf32>
    %42 = arith.addf %41, %21 : vector<8x128xf32>
    %43 = math.exp %40 : vector<8x128xf32>
    %cst_9 = arith.constant 5.000000e-01 : f32
    %44 = vector.broadcast %cst_9 : f32 to vector<8x128xf32>
    %45 = arith.mulf %24, %44 : vector<8x128xf32>
    %46 = arith.mulf %43, %45 : vector<8x128xf32>
    %47 = vector.broadcast %13 : vector<1x128xf32> to vector<8x128xf32>
    %48 = arith.mulf %47, %46 : vector<8x128xf32>
    %49 = arith.subf %42, %48 : vector<8x128xf32>
    %c0_10 = arith.constant 0 : index
    %c0_11 = arith.constant 0 : index
    %50 = vector.load %arg3[%c0_10, %c0_11] : memref<8x128xf32, #tpu.memory_space<vmem>>, vector<8x128xf32>
    tpu.vector_store %arg3[%c0_10, %c0_11], %49 {strides = array<i32>} : memref<8x128xf32, #tpu.memory_space<vmem>>, vector<8x128xf32>,
    return
  }
  func.func @transform_0(%arg0: i32) -> (i32, i32) {
    %c0_i32 = arith.constant 0 : i32
    %c0_i32_0 = arith.constant 0 : i32
    return %arg0, %c0_i32 : i32, i32
  }
  func.func @transform_1(%arg0: i32) -> (i32, i32) {
    %c0_i32 = arith.constant 0 : i32
    %c0_i32_0 = arith.constant 0 : i32
    return %arg0, %c0_i32 : i32, i32
  }
  func.func @transform_2(%arg0: i32) -> (i32, i32) {
    %c0_i32 = arith.constant 0 : i32
    %c0_i32_0 = arith.constant 0 : i32
    return %arg0, %c0_i32 : i32, i32
  }
}

</mosaic_0001>

<llo_original>
// kernel: tpu_custom_call.1
$region0: #{tpu_custom_call.1}
  #allocation0 [shape = 'u32[]', space=smem, size = 0x4, offset = 0x4, fixed_abs, tag = 'smem constant byte address 0x4 - core index']
  #allocation1 [shape = 'u32[144,128]{1,0:T(1,128)}', space=vmem, size = 0x12000, scoped, tag = 'internal scratch']
  %s0 = inlined_call_operand.hbm [shape: f32[16,128], index: 0, kind: input, shape index: {}]
  %s1 = inlined_call_operand.hbm [shape: f32[16,128], index: 1, kind: input, shape index: {}]
  %s2 = inlined_call_operand.hbm [shape: f32[16,128], index: 2, kind: output, shape index: {}]
  %s3 = sld [smem:[#allocation0]]
  $region49: #{tpu_custom_call.1} parent=0
    _
  %s5 = ssub.s32 1, %s3
  %s6 = scalar_select 0, %s5, %s3
  $region1: #{tpu_custom_call.1} parent=0
    #allocation2 [shape = 'u8[8192]{0}', space=vmem, size = 0x2000, scoped, tag = 'input window, operand 0']
    #allocation3 [shape = 's32[2]{0}', space=sflag, size = 0x8, scoped, tag = 'scoped memory for tpu_custom_call.1']
    #allocation4 [shape = 's32[2]{0}', space=sflag, size = 0x8, scoped, tag = 'scoped memory for tpu_custom_call.1']
    #allocation5 [shape = 'u8[8192]{0}', space=vmem, size = 0x2000, scoped, tag = 'input window, operand 1']
    #allocation6 [shape = 's32[2]{0}', space=sflag, size = 0x8, scoped, tag = 'scoped memory for tpu_custom_call.1']
    #allocation7 [shape = 'u8[8192]{0}', space=vmem, size = 0x2000, scoped, tag = 'output window, operand 0']
    %7 = vsyncpa [#allocation3], 0
    %s8 = scalar_lea.sflag [#allocation3], 1
    %9 = vsyncpa %s8, 0
    %10 = vsyncpa [#allocation6], 0
    %s11 = scalar_lea.sflag [#allocation6], 1
    %12 = vsyncpa %s11, 0
    %13 = vsyncpa [#allocation4], 0
    %s14 = scalar_lea.sflag [#allocation4], 1
    %15 = vsyncpa %s14, 0
    loop: start=0, step=1, limit=4
    $region2: #{tpu_custom_call.1} parent=1 // loop_pre_header
      _
    $region3: #{tpu_custom_call.1} parent=1 // loop_header
      %s17 = sphi 0, %s21
      %p18 = scmp.ge.s32.totalorder %s17, 4
      %s27 = sphi 0, %s29
      %s30 = sphi 0, %s27
      %s31 = sphi 0, %s30
      %s47 = sphi 0, %s31
      %s53 = sphi 0, %s55
      %s56 = sphi 0, %s53
      %s57 = sphi 0, %s56
      %s73 = sphi 0, %s57
      %s79 = sphi 0, %s81
      %s82 = sphi 0, %s79
      %s83 = sphi 0, %s82
      %s99 = sphi 0, %s83
    $region4: #{tpu_custom_call.1} parent=1 // loop_header_branch
      %20 = sbr.rel (%p18) target = $region8
    $region5: #{tpu_custom_call.1} parent=1 // loop_body
      %s22 = ssub.s32 %s17, 1
      %s23 = ssub.s32 %s17, 2
      %s24 = sadd.s32 %s17, 1
      %s25 = ssub.s32 %s17, %s24
      %p26 = scmp.eq.s32.totalorder %s25, 0
      %s28 = sadd.s32 %s27, 1
      %s29 = scalar_select %p26, %s27, %s28
      %p32 = pneg %p26
      %p33 = scmp.eq.s32.totalorder %s17, 1
      %p34 = por %p32, %p33
      %p35 = scmp.ne.s32.totalorder %s27, %s30
      %p36 = scmp.eq.s32.totalorder %s17, 0
      %p37 = por %p35, %p36
      %p38 = scmp.ne.s32.totalorder %s27, %s30
      %p39 = scmp.eq.s32.totalorder %s22, 1
      %p40 = por %p38, %p39
      %p41 = scmp.ne.s32.totalorder %s30, %s31
      %p42 = scmp.eq.s32.totalorder %s22, 0
      %p43 = por %p41, %p42
      %p44 = scmp.ne.s32.totalorder %s30, %s31
      %p45 = scmp.eq.s32.totalorder %s23, 1
      %p46 = por %p44, %p45
      %p48 = scmp.ne.s32.totalorder %s31, %s47
      %p49 = scmp.eq.s32.totalorder %s23, 0
      %p50 = por %p48, %p49
      %s51 = ssub.s32 %s17, %s24
      %p52 = scmp.eq.s32.totalorder %s51, 0
      %s54 = sadd.s32 %s53, 1
      %s55 = scalar_select %p52, %s53, %s54
      %p58 = pneg %p52
      %p59 = scmp.eq.s32.totalorder %s17, 1
      %p60 = por %p58, %p59
      %p61 = scmp.ne.s32.totalorder %s53, %s56
      %p62 = scmp.eq.s32.totalorder %s17, 0
      %p63 = por %p61, %p62
      %p64 = scmp.ne.s32.totalorder %s53, %s56
      %p65 = scmp.eq.s32.totalorder %s22, 1
      %p66 = por %p64, %p65
      %p67 = scmp.ne.s32.totalorder %s56, %s57
      %p68 = scmp.eq.s32.totalorder %s22, 0
      %p69 = por %p67, %p68
      %p70 = scmp.ne.s32.totalorder %s56, %s57
      %p71 = scmp.eq.s32.totalorder %s23, 1
      %p72 = por %p70, %p71
      %p74 = scmp.ne.s32.totalorder %s57, %s73
      %p75 = scmp.eq.s32.totalorder %s23, 0
      %p76 = por %p74, %p75
      %s77 = ssub.s32 %s17, %s24
      %p78 = scmp.eq.s32.totalorder %s77, 0
      %s80 = sadd.s32 %s79, 1
      %s81 = scalar_select %p78, %s79, %s80
      %p84 = pneg %p78
      %p85 = scmp.eq.s32.totalorder %s17, 1
      %p86 = por %p84, %p85
      %p87 = scmp.ne.s32.totalorder %s79, %s82
      %p88 = scmp.eq.s32.totalorder %s17, 0
      %p89 = por %p87, %p88
      %p90 = scmp.ne.s32.totalorder %s79, %s82
      %p91 = scmp.eq.s32.totalorder %s22, 1
      %p92 = por %p90, %p91
      %p93 = scmp.ne.s32.totalorder %s82, %s83
      %p94 = scmp.eq.s32.totalorder %s22, 0
      %p95 = por %p93, %p94
      %p96 = scmp.ne.s32.totalorder %s82, %s83
      %p97 = scmp.eq.s32.totalorder %s23, 1
      %p98 = por %p96, %p97
      %p100 = scmp.ne.s32.totalorder %s83, %s99
      %p101 = scmp.eq.s32.totalorder %s23, 0
      %p102 = por %p100, %p101
      %p103 = scmp.le.s32.totalorder 1, %s17
      %p104 = scmp.lt.s32.totalorder %s17, 3
      %p105 = pnand %p103, %p104
      %p106 = pneg %p105
      // Predicated region
      $region9: #{tpu_custom_call.1} parent=5 // pred_check
        _
      $region10: #{tpu_custom_call.1} parent=5 // pred_check_branch
        %108 = sbr.rel (%p105) target = $region12
      $region11: #{tpu_custom_call.1} parent=5 // pred_region
        %s109 = ssub.s32 %s17, 1
      $region12: #{tpu_custom_call.1} parent=5 // pred_fallthru
        _
      %p110 = scmp.lt.s32.totalorder %s17, 2
      // Predicated region
      $region13: #{tpu_custom_call.1} parent=5 // pred_check
        %p111 = pneg %p110
      $region14: #{tpu_custom_call.1} parent=5 // pred_check_branch
        %113 = sbr.rel (%p111) target = $region16
      $region15: #{tpu_custom_call.1} parent=5 // pred_region
        // Predicated region
        $region17: #{tpu_custom_call.1} parent=15 // pred_check
          %p114 = pneg %p37
        $region18: #{tpu_custom_call.1} parent=15 // pred_check_branch
          %116 = sbr.rel (%p114) target = $region20
        $region19: #{tpu_custom_call.1} parent=15 // pred_region
          %s117 = sand.u32 %s27, 1
          %s118 = scalar_lea.sflag [#allocation3], %s117
          %s119 = sand.u32 %s27, 1
          %s120 = smul.addr %s119, 8
          %s121 = scalar_lea.vmem [#allocation2], %s120
          %s123 = ssub.s32 128, 128
          %124 = vsyncadd %s118, %s123
          %s125 = smul.addr %s17, 128
          %s126 = scalar_lea.hbm %s0, %s125
          %s128 = sshll.u32 %s121, 4
          %s129 = int_to_ptr.vmem [resolvable:$true] %s128
          %131 = dma.hbm_to_vmem [thread:$0]  %s126, 128, %s129, %s118
        $region20: #{tpu_custom_call.1} parent=15 // pred_fallthru
          _
        // Predicated region
        $region21: #{tpu_custom_call.1} parent=15 // pred_check
          %p132 = pneg %p63
        $region22: #{tpu_custom_call.1} parent=15 // pred_check_branch
          %134 = sbr.rel (%p132) target = $region24
        $region23: #{tpu_custom_call.1} parent=15 // pred_region
          %s135 = sand.u32 %s53, 1
          %s136 = scalar_lea.sflag [#allocation6], %s135
          %s137 = sand.u32 %s53, 1
          %s138 = smul.addr %s137, 8
          %s139 = scalar_lea.vmem [#allocation5], %s138
          %s141 = ssub.s32 128, 128
          %142 = vsyncadd %s136, %s141
          %s143 = smul.addr %s17, 128
          %s144 = scalar_lea.hbm %s1, %s143
          %s146 = sshll.u32 %s139, 4
          %s147 = int_to_ptr.vmem [resolvable:$true] %s146
          %149 = dma.hbm_to_vmem [thread:$0]  %s144, 128, %s147, %s136
        $region24: #{tpu_custom_call.1} parent=15 // pred_fallthru
          _
      $region16: #{tpu_custom_call.1} parent=5 // pred_fallthru
        _
      %p150 = scmp.le.s32.totalorder 1, %s17
      %p151 = scmp.lt.s32.totalorder %s17, 3
      %p152 = pnand %p150, %p151
      %p153 = pneg %p152
      // Predicated region
      $region25: #{tpu_custom_call.1} parent=5 // pred_check
        _
      $region26: #{tpu_custom_call.1} parent=5 // pred_check_branch
        %155 = sbr.rel (%p152) target = $region28
      $region27: #{tpu_custom_call.1} parent=5 // pred_region
        %s156 = ssub.s32 %s17, 1
        %s157 = sand.u32 %s30, 1
        %s158 = scalar_lea.sflag [#allocation3], %s157
        %s159 = sand.u32 %s30, 1
        %s160 = smul.addr %s159, 8
        %s161 = scalar_lea.vmem [#allocation2], %s160
        // Predicated region
        $region29: #{tpu_custom_call.1} parent=27 // pred_check
          %p162 = pneg %p43
        $region30: #{tpu_custom_call.1} parent=27 // pred_check_branch
          %164 = sbr.rel (%p162) target = $region32
        $region31: #{tpu_custom_call.1} parent=27 // pred_region
          %165 = dma.done %s158, 128
        $region32: #{tpu_custom_call.1} parent=27 // pred_fallthru
          _
        %s166 = sand.u32 %s56, 1
        %s167 = scalar_lea.sflag [#allocation6], %s166
        %s168 = sand.u32 %s56, 1
        %s169 = smul.addr %s168, 8
        %s170 = scalar_lea.vmem [#allocation5], %s169
        // Predicated region
        $region33: #{tpu_custom_call.1} parent=27 // pred_check
          %p171 = pneg %p69
        $region34: #{tpu_custom_call.1} parent=27 // pred_check_branch
          %173 = sbr.rel (%p171) target = $region36
        $region35: #{tpu_custom_call.1} parent=27 // pred_region
          %174 = dma.done %s167, 128
        $region36: #{tpu_custom_call.1} parent=27 // pred_fallthru
          _
        %s175 = sand.u32 %s30, 1
        %s176 = scalar_lea.sflag [#allocation3], %s175
        %s177 = sand.u32 %s30, 1
        %s178 = smul.addr %s177, 8
        %s179 = scalar_lea.vmem [#allocation2], %s178
        %p180 = pneg %p43
        %p181 = pneg %p40
        %s182 = sand.u32 %s56, 1
        %s183 = scalar_lea.sflag [#allocation6], %s182
        %s184 = sand.u32 %s56, 1
        %s185 = smul.addr %s184, 8
        %s186 = scalar_lea.vmem [#allocation5], %s185
        %p187 = pneg %p69
        %p188 = pneg %p66
        %p189 = pneg %p95
        %p190 = pneg %p92
        %s191 = sand.u32 %s82, 1
        %s192 = scalar_lea.sflag [#allocation4], %s191
        %s193 = sand.u32 %s82, 1
        %s194 = smul.addr %s193, 8
        %s195 = scalar_lea.vmem [#allocation7], %s194
        %v196 = vld [vmem:[%s161] sm:$0xff]
        %v197 = vld [vmem:[%s170] sm:$0xff]
        %v198 = vlaneseq
        %v199 = vand.u32 %v198, 127
        %v200 = vand.u32 %v199, 3
        %vm201 = vcmp.lt.s32.totalorder %v200, 2
        %v202 = vand.u32 %v199, 1
        %vm203 = vcmp.eq.s32.totalorder %v202, 0
        %v204 = vsel %vm201, 1.0, -1.0
        %205 = vrot.lane.b32.xlu0 %v196, 126
        %v206 = vpop.permute.xlu0 %205
        %207 = vrot.lane.b32.xlu0 %v196, 2
        %v208 = vpop.permute.xlu0 %207
        %v209 = vsel %vm201, 1, 0
        %vm210 = vcmp.eq.s32.totalorder %v209, 1
        %v211 = vsel %vm210, %v206, %v208
        %v212 = vadd.f32 %v196, %v211
        %v213 = vmul.f32 %v212, 0.5
        %v214 = vsub.f32 %v211, %v196
        %v215 = vmul.f32 %v204, %v214
        %216 = vrot.lane.b32.xlu0 %v197, 127
        %v217 = vpop.permute.xlu0 %216
        %218 = vrot.lane.b32.xlu0 %v197, 1
        %v219 = vpop.permute.xlu0 %218
        %v220 = vsel %vm203, 1, 0
        %vm221 = vcmp.eq.s32.totalorder %v220, 1
        %v222 = vsel %vm221, %v217, %v219
        %223 = vrot.lane.b32.xlu0 %v222, 126
        %v224 = vpop.permute.xlu0 %223
        %225 = vrot.lane.b32.xlu0 %v222, 2
        %v226 = vpop.permute.xlu0 %225
        %v227 = vsel %vm210, %v222, %v226
        %v228 = vsel %vm210, %v224, %v222
        %v229 = vmul.f32 %v227, %v215
        %v230 = vadd.f32 %v229, %v213
        %v231 = vmul.f32 %v228, 1.442695
        %v232 = vpow.pop %v231
        %v233 = vmul.f32 %v215, 0.5
        %v234 = vmul.f32 %v232, %v233
        %v235 = vmul.f32 %v204, %v234
        %v236 = vsub.f32 %v230, %v235
        %237 = vst [vmem:[%s195] sm:$0xff] %v236
        %s238 = sand.u32 %s82, 1
        %s239 = scalar_lea.sflag [#allocation4], %s238
        %s240 = sand.u32 %s82, 1
        %s241 = smul.addr %s240, 8
        %s242 = scalar_lea.vmem [#allocation7], %s241
        // Predicated region
        $region37: #{tpu_custom_call.1} parent=27 // pred_check
          %p243 = pneg %p92
        $region38: #{tpu_custom_call.1} parent=27 // pred_check_branch
          %245 = sbr.rel (%p243) target = $region40
        $region39: #{tpu_custom_call.1} parent=27 // pred_region
          %s247 = ssub.s32 128, 128
          %248 = vsyncadd %s239, %s247
          %s249 = smul.addr %s22, 128
          %s250 = scalar_lea.hbm %s2, %s249
          %s252 = sshll.u32 %s242, 4
          %s253 = int_to_ptr.vmem [resolvable:$true] %s252
          %255 = dma.vmem_to_hbm [thread:$0]  %s253, 128, %s250, %s239
        $region40: #{tpu_custom_call.1} parent=27 // pred_fallthru
          _
      $region28: #{tpu_custom_call.1} parent=5 // pred_fallthru
        _
      %p256 = scmp.le.s32.totalorder 2, %s17
      // Predicated region
      $region41: #{tpu_custom_call.1} parent=5 // pred_check
        %p257 = pneg %p256
      $region42: #{tpu_custom_call.1} parent=5 // pred_check_branch
        %259 = sbr.rel (%p257) target = $region44
      $region43: #{tpu_custom_call.1} parent=5 // pred_region
        %s260 = ssub.s32 %s17, 2
        // Predicated region
        $region45: #{tpu_custom_call.1} parent=43 // pred_check
          %p261 = pneg %p98
        $region46: #{tpu_custom_call.1} parent=43 // pred_check_branch
          %263 = sbr.rel (%p261) target = $region48
        $region47: #{tpu_custom_call.1} parent=43 // pred_region
          %s264 = sand.u32 %s83, 1
          %s265 = scalar_lea.sflag [#allocation4], %s264
          %s266 = sand.u32 %s83, 1
          %s267 = smul.addr %s266, 8
          %s268 = scalar_lea.vmem [#allocation7], %s267
          %269 = dma.done %s265, 128
        $region48: #{tpu_custom_call.1} parent=43 // pred_fallthru
          _
      $region44: #{tpu_custom_call.1} parent=5 // pred_fallthru
        _
    $region6: #{tpu_custom_call.1} parent=1 // loop_footer
      %s21 = sadd.s32 1, %s17
    $region7: #{tpu_custom_call.1} parent=1 // loop_footer_branch
      %16 = sbr.rel target = $region3
    $region8: #{tpu_custom_call.1} parent=1 // loop_exit
      _
    %270 = vsyncpa [#allocation3], 1
    %s271 = scalar_lea.sflag [#allocation3], 1
    %272 = vsyncpa %s271, 1
    %273 = vsyncpa [#allocation6], 1
    %s274 = scalar_lea.sflag [#allocation6], 1
    %275 = vsyncpa %s274, 1
    %276 = vsyncpa [#allocation4], 1
    %s277 = scalar_lea.sflag [#allocation4], 1
    %278 = vsyncpa %s277, 1

</llo_original>
